<compile_context>
chip_gen: v7x
topology: tpu7x:2x2x1
jax: 0.10.0
libtpu: 0.0.40
codegen_flags: <defaults>
</compile_context>

<pallas_src>
import numpy as np
import jax
import jax.numpy as jnp
from jax.experimental import pallas as pl
from jax.experimental.pallas import tpu as pltpu


# -----------------------------------------------------------------------------
# Parameter construction (deterministic, mirrors DensityEstimator.__init__)
# -----------------------------------------------------------------------------
def create_circular_kernel(kernel_size_px: int, picture_resolution: int) -> np.ndarray:
    diameter_size_px = kernel_size_px
    radius_px = diameter_size_px / 2
    radius_m = radius_px * picture_resolution
    area_m2 = np.pi * radius_m ** 2
    kernel = np.zeros((diameter_size_px, diameter_size_px))
    for i in range(diameter_size_px):
        for j in range(diameter_size_px):
            x_m = i * picture_resolution - radius_m
            y_m = j * picture_resolution - radius_m
            if x_m ** 2 + y_m ** 2 <= radius_m ** 2:
                kernel[i, j] = 1.0
            else:
                kernel[i, j] = 0.0
    return (kernel / area_m2).astype(np.float32)  # (K1, K1)


def build_density_estimator_weights(*, density_buffer: int, smoothing_buffer: int,
                                    picture_resolution: int):
    k1 = int(density_buffer / picture_resolution)
    k1 += 1 - k1 % 2
    w1 = create_circular_kernel(k1, picture_resolution)

    w2 = None
    if smoothing_buffer > 0:
        k2 = int(smoothing_buffer / picture_resolution)
        k2 += 1 - k2 % 2
        w2 = (np.ones((k2, k2), dtype=np.float32) / float(k2 ** 2))
    return w1, w2


# -----------------------------------------------------------------------------
# Offline factorization:  conv_2(conv_1(X))  ==  sum_r  L_r @ X @ R_r
# -----------------------------------------------------------------------------
def _build_lr_operators(w1, w2, H: int, W: int):
    """Factor the fused zero-'same'-padded conv_1 -> conv_2 into banded matmul pairs.

    conv_1(X) = sum_r V_r @ X @ H_r   (rows of the disc kernel grouped by their
                                       single constant-weight contiguous run)
    conv_2(Y) = V2 @ Y @ H2           (box filter is separable)
    =>  out   = sum_r (V2 @ V_r) @ X @ (H_r @ H2) = sum_r L_r @ X @ R_r
    Zero 'same' padding is encoded by truncating every band at the image edge.
    """
    w1 = np.asarray(w1, np.float64)
    K1 = int(w1.shape[0])
    p1 = (K1 - 1) // 2

    runs = {}
    for i in range(K1):
        nz = np.nonzero(w1[i])[0]
        if nz.size == 0:
            continue
        lo, hi = int(nz[0]), int(nz[-1])
        # Correctness guard: each row must be ONE contiguous run of ONE constant.
        assert nz.size == hi - lo + 1 and np.allclose(w1[i, lo:hi + 1], w1[i, lo]), (
            "conv_1 kernel row is not a single constant-valued contiguous run")
        runs.setdefault((lo, hi, float(w1[i, lo])), []).append(i)

    if w2 is not None:
        w2 = np.asarray(w2, np.float64)
        K2 = int(w2.shape[0])
        p2 = (K2 - 1) // 2
        assert np.allclose(w2, w2[0, 0]), "conv_2 kernel must be a constant box filter"
        s = float(np.sqrt(w2[0, 0]))      # = 1/K2
        V2 = np.zeros((H, H))
        H2 = np.zeros((W, W))
        for a in range(H):
            for c in range(max(0, a - p2), min(H, a + p2 + 1)):
                V2[a, c] = s
        for c in range(W):
            for b in range(max(0, c - p2), min(W, c + p2 + 1)):
                H2[c, b] = s
    else:
        V2 = np.eye(H)
        H2 = np.eye(W)

    Ls, Rs = [], []
    for (lo, hi, wv), rows in runs.items():
        Vr = np.zeros((H, H))
        Hr = np.zeros((W, W))
        for a in range(H):
            for i in rows:
                c = a + i - p1
                if 0 <= c < H:
                    Vr[a, c] = wv
        for b in range(W):
            for j in range(lo, hi + 1):
                c = b + j - p1
                if 0 <= c < W:
                    Hr[c, b] = 1.0
        Ls.append(V2 @ Vr)
        Rs.append(Hr @ H2)

    if not Ls:  # degenerate all-zero conv_1 kernel -> output is all zeros
        Ls, Rs = [np.zeros((H, H))], [np.zeros((W, W))]

    return np.stack(Ls).astype(np.float32), np.stack(Rs).astype(np.float32)


def _blockdiag(mats: np.ndarray, Bt: int) -> np.ndarray:
    """Replicate each (W, W) right operator block-diagonally for Bt lane-packed images."""
    n, W, _ = mats.shape
    LW = Bt * W
    out = np.zeros((n, LW, LW), np.float32)
    for r in range(n):
        for b in range(Bt):
            out[r, b * W:(b + 1) * W, b * W:(b + 1) * W] = mats[r]
    return out


# -----------------------------------------------------------------------------
# Pallas kernel: pure MXU — out_slab = sum_r L_r @ X_slab @ Rbig_r
# -----------------------------------------------------------------------------
def _make_kernel(n_runs: int):
    HIGHEST = jax.lax.Precision.HIGHEST

    def kernel(x_ref, l_ref, r_ref, o_ref):
        x = x_ref[...]                                   # (H, Bt*W) lane-dense slab
        acc = None
        for r in range(n_runs):
            t = jnp.dot(l_ref[r], x,
                        precision=HIGHEST, preferred_element_type=jnp.float32)
            t = jnp.dot(t, r_ref[r],
                        precision=HIGHEST, preferred_element_type=jnp.float32)
            acc = t if acc is None else acc + t
        o_ref[...] = acc.astype(o_ref.dtype)             # one unmasked lane-dense store

    return kernel


# -----------------------------------------------------------------------------
# Packing choice: lane width Bt*W targets {128, 256, 512}
# -----------------------------------------------------------------------------
def _choose_bt(B: int, W: int) -> int:
    if W >= 128:
        return 1
    bt = max(1, 128 // W)            # minimum for a full 128-lane vreg
    for lanes in (512, 256):         # grow the slab only if the batch can fill it
        cand = max(1, lanes // W)
        if B >= cand:
            bt = cand
            break
    return bt


# -----------------------------------------------------------------------------
# Fused forward:  (N, C, H, W) -> view(N*C, H, W) -> [conv_1 -> conv_2] -> view back
# -----------------------------------------------------------------------------
def fused_density_conv(x_bhw: jnp.ndarray, w1_np: np.ndarray, w2_np) -> jnp.ndarray:
    B, H, W = map(int, x_bhw.shape)
    Bt = _choose_bt(B, W)
    G = -(-B // Bt)                   # ceil-div; batch is zero-padded to G*Bt images
    Bp = G * Bt
    LW = Bt * W

    L_np, R_np = _build_lr_operators(w1_np, w2_np, H, W)
    Rbig_np = _blockdiag(R_np, Bt)
    n_runs = int(L_np.shape[0])

    L = jnp.asarray(L_np)             # (n_runs, H, H)
    Rbig = jnp.asarray(Rbig_np)       # (n_runs, LW, LW)

    # Lane-dense packing: Bt images side by side along the 128-lane axis.
    xp = x_bhw.astype(jnp.float32)
    if Bp != B:
        xp = jnp.concatenate([xp, jnp.zeros((Bp - B, H, W), jnp.float32)], axis=0)
    x_packed = xp.reshape(G, Bt, H, W).transpose(0, 2, 1, 3).reshape(G * H, LW)

    flops = 2 * G * n_runs * (H * H * LW + H * LW * LW)
    bytes_accessed = 4 * (2 * G * H * LW + n_runs * (H * H + LW * LW))
    cost = pl.CostEstimate(flops=flops, transcendentals=0, bytes_accessed=bytes_accessed)

    vmem_est = 4 * (4 * H * LW + 2 * n_runs * H * H + 2 * n_runs * LW * LW)
    vmem_limit = int(min(96 << 20, max(8 << 20, 4 * vmem_est)))

    y_packed = pl.pallas_call(
        _make_kernel(n_runs),
        out_shape=jax.ShapeDtypeStruct((G * H, LW), jnp.float32),
        grid_spec=pltpu.PrefetchScalarGridSpec(
            num_scalar_prefetch=0,
            grid=(G,),
            in_specs=[
                pl.BlockSpec((H, LW), lambda g: (g, 0)),
                pl.BlockSpec((n_runs, H, H), lambda g: (0, 0, 0)),
                pl.BlockSpec((n_runs, LW, LW), lambda g: (0, 0, 0)),
            ],
            out_specs=pl.BlockSpec((H, LW), lambda g: (g, 0)),
        ),
        compiler_params=pltpu.CompilerParams(
            dimension_semantics=("parallel",),
            vmem_limit_bytes=vmem_limit),
        cost_estimate=cost,
    )(x_packed, L, Rbig)

    # Un-pack in XLA (cheap reshape/transpose), drop zero-padded dummy images.
    y = y_packed.reshape(G, H, Bt, W).transpose(0, 2, 1, 3).reshape(Bp, H, W)
    return y[:B]


def density_estimator_forward(x_nchw: jnp.ndarray, w1_np: np.ndarray, w2_np) -> jnp.ndarray:
    N, C, H, W = map(int, x_nchw.shape)
    xb = x_nchw.reshape(N * C, H, W).astype(jnp.float32)
    y = fused_density_conv(xb, w1_np, w2_np)
    return y.reshape(N, C, H, W)


# -----------------------------------------------------------------------------
# Pure-numpy reference for correctness
# -----------------------------------------------------------------------------
def _ref_conv(xb: np.ndarray, w: np.ndarray) -> np.ndarray:
    B, H, W = xb.shape
    K = w.shape[0]
    p = (K - 1) // 2
    xp = np.pad(xb, ((0, 0), (p, p), (p, p)))
    out = np.zeros((B, H, W), np.float32)
    for i in range(K):
        for j in range(K):
            out += w[i, j] * xp[:, i:i + H, j:j + W]
    return out


def _ref_forward(x_nchw: np.ndarray, w1: np.ndarray, w2) -> np.ndarray:
    N, C, H, W = x_nchw.shape
    xb = x_nchw.reshape(N * C, H, W).astype(np.float32)
    y = _ref_conv(xb, w1)
    if w2 is not None:
        y = _ref_conv(y, w2)
    return y.reshape(N, C, H, W)


if __name__ == "__main__":
    # Small, module-consistent config
    N, C, H, W = 2, 4, 16, 16
    density_buffer, smoothing_buffer, picture_resolution = 5, 3, 1

    w1, w2 = build_density_estimator_weights(
        density_buffer=density_buffer,
        smoothing_buffer=smoothing_buffer,
        picture_resolution=picture_resolution,
    )

    x = jax.random.normal(jax.random.PRNGKey(0), (N, C, H, W), dtype=jnp.float32)

    y = density_estimator_forward(x, w1, w2)
    y = jax.block_until_ready(y)

    y_ref = _ref_forward(np.asarray(x), w1, w2)
    np.testing.assert_allclose(np.asarray(y), y_ref, rtol=1e-4, atol=1e-5)

    print("KERNEL_OK")
</pallas_src>

<mosaic_0001>
module attributes {stable_mosaic.version = 11 : i64} {
  func.func @kernel(%arg0: i32, %arg1: memref<16x128xf32, #tpu.memory_space<vmem>>, %arg2: memref<1x16x16xf32, #tpu.memory_space<vmem>>, %arg3: memref<1x128x128xf32, #tpu.memory_space<vmem>>, %arg4: memref<16x128xf32, #tpu.memory_space<vmem>>) attributes {dimension_semantics = [#tpu.dimension_semantics<parallel>], iteration_bounds = array<i64: 1>, scalar_prefetch = 0 : i64, scratch_operands = 0 : i64, tpu.core_type = #tpu.core_type<tc>, window_params = [{transform_indices = @transform_0, window_bounds = array<i64: 16, 128>}, {pipeline_mode = #tpu.pipeline_mode<synchronous>, transform_indices = @transform_1, window_bounds = array<i64: 1, 16, 16>}, {pipeline_mode = #tpu.pipeline_mode<synchronous>, transform_indices = @transform_2, window_bounds = array<i64: 1, 128, 128>}, {transform_indices = @transform_3, window_bounds = array<i64: 16, 128>}]} {
    %c0 = arith.constant 0 : index
    %c0_0 = arith.constant 0 : index
    %0 = vector.load %arg1[%c0, %c0_0] : memref<16x128xf32, #tpu.memory_space<vmem>>, vector<16x128xf32>
    %c0_1 = arith.constant 0 : index
    %c0_2 = arith.constant 0 : index
    %c0_3 = arith.constant 0 : index
    %1 = vector.load %arg2[%c0_1, %c0_2, %c0_3] : memref<1x16x16xf32, #tpu.memory_space<vmem>>, vector<1x16x16xf32>
    %2 = vector.shape_cast %1 : vector<1x16x16xf32> to vector<16x16xf32>
    %cst = arith.constant dense<0.000000e+00> : vector<16x128xf32>
    %3 = tpu.matmul %2, %0, %cst {dimension_numbers = #tpu.dot_dimension_numbers<[1], [0], [0], [1], [0, 0, 1, 1], [], []>, precision = #tpu.contract_precision<fp32>} : vector<16x16xf32>, vector<16x128xf32>, vector<16x128xf32> -> vector<16x128xf32>
    %c0_4 = arith.constant 0 : index
    %c0_5 = arith.constant 0 : index
    %c0_6 = arith.constant 0 : index
    %4 = vector.load %arg3[%c0_4, %c0_5, %c0_6] : memref<1x128x128xf32, #tpu.memory_space<vmem>>, vector<1x128x128xf32>
    %5 = vector.shape_cast %4 : vector<1x128x128xf32> to vector<128x128xf32>
    %cst_7 = arith.constant dense<0.000000e+00> : vector<16x128xf32>
    %6 = tpu.matmul %3, %5, %cst_7 {dimension_numbers = #tpu.dot_dimension_numbers<[1], [0], [0], [1], [0, 0, 1, 1], [], []>, precision = #tpu.contract_precision<fp32>} : vector<16x128xf32>, vector<128x128xf32>, vector<16x128xf32> -> vector<16x128xf32>
    %c0_8 = arith.constant 0 : index
    %c0_9 = arith.constant 0 : index
    %7 = vector.load %arg4[%c0_8, %c0_9] : memref<16x128xf32, #tpu.memory_space<vmem>>, vector<16x128xf32>
    tpu.vector_store %arg4[%c0_8, %c0_9], %6 {strides = array<i32>} : memref<16x128xf32, #tpu.memory_space<vmem>>, vector<16x128xf32>,
    return
  }
  func.func @transform_0(%arg0: i32) -> (i32, i32) {
    %c0_i32 = arith.constant 0 : i32
    %c0_i32_0 = arith.constant 0 : i32
    return %arg0, %c0_i32 : i32, i32
  }
  func.func @transform_1(%arg0: i32) -> (i32, i32, i32) {
    %c0_i32 = arith.constant 0 : i32
    %c0_i32_0 = arith.constant 0 : i32
    %c0_i32_1 = arith.constant 0 : i32
    %c0_i32_2 = arith.constant 0 : i32
    return %c0_i32, %c0_i32_0, %c0_i32_1 : i32, i32, i32
  }
  func.func @transform_2(%arg0: i32) -> (i32, i32, i32) {
    %c0_i32 = arith.constant 0 : i32
    %c0_i32_0 = arith.constant 0 : i32
    %c0_i32_1 = arith.constant 0 : i32
    %c0_i32_2 = arith.constant 0 : i32
    return %c0_i32, %c0_i32_0, %c0_i32_1 : i32, i32, i32
  }
  func.func @transform_3(%arg0: i32) -> (i32, i32) {
    %c0_i32 = arith.constant 0 : i32
    %c0_i32_0 = arith.constant 0 : i32
    return %arg0, %c0_i32 : i32, i32
  }
}

</mosaic_0001>

<llo_original>
// kernel: tpu_custom_call.1
$region0: #{tpu_custom_call.1}
  #allocation0 [shape = 'u32[]', space=smem, size = 0x4, offset = 0x4, fixed_abs, tag = 'smem constant byte address 0x4 - core index']
  #allocation1 [shape = 'u32[144,128]{1,0:T(1,128)}', space=vmem, size = 0x12000, scoped, tag = 'internal scratch']
  %s0 = inlined_call_operand.hbm [shape: f32[16,128], index: 0, kind: input, shape index: {}]
  %s1 = inlined_call_operand.hbm [shape: f32[1,16,16], index: 1, kind: input, shape index: {}]
  %s2 = inlined_call_operand.hbm [shape: f32[1,128,128], index: 2, kind: input, shape index: {}]
  %s3 = inlined_call_operand.hbm [shape: f32[16,128], index: 3, kind: output, shape index: {}]
  %s4 = sld [smem:[#allocation0]]
  $region34: #{tpu_custom_call.1} parent=0
    _
  %s6 = ssub.s32 1, %s4
  %s7 = scalar_select 0, %s6, %s4
  $region1: #{tpu_custom_call.1} parent=0
    #allocation2 [shape = 'u8[8192]{0}', space=vmem, size = 0x2000, scoped, tag = 'input window, operand 0, single buffered']
    #allocation3 [shape = 's32[1]{0}', space=sflag, size = 0x4, scoped, tag = 'scoped memory for tpu_custom_call.1']
    #allocation4 [shape = 's32[1]{0}', space=sflag, size = 0x4, scoped, tag = 'scoped memory for tpu_custom_call.1']
    #allocation5 [shape = 'u8[8192]{0}', space=vmem, size = 0x2000, scoped, tag = 'input window, operand 1, single buffered']
    #allocation6 [shape = 's32[1]{0}', space=sflag, size = 0x4, scoped, tag = 'scoped memory for tpu_custom_call.1']
    #allocation7 [shape = 'u8[65536]{0}', space=vmem, size = 0x10000, scoped, tag = 'input window, operand 2, single buffered']
    #allocation8 [shape = 'u8[8192]{0}', space=vmem, size = 0x2000, scoped, tag = 'output window, operand 0, single buffered']
    %8 = vsyncpa [#allocation3], 0
    %9 = vsyncpa [#allocation6], 0
    %10 = vsyncpa [#allocation4], 0
    // Predicated region
    $region2: #{tpu_custom_call.1} parent=1 // pred_check
      _
    $region3: #{tpu_custom_call.1} parent=1 // pred_check_branch
      %12 = sbr.rel (0) target = $region5
    $region4: #{tpu_custom_call.1} parent=1 // pred_region
      %s14 = ssub.s32 256, 256
      %15 = vsyncadd [#allocation3], %s14
      %s16 = sshll.u32 [#allocation2], 4
      %s17 = int_to_ptr.vmem [resolvable:$true] %s16
      %22 = dma.hbm_to_vmem [thread:$0]  %s0, 256, %s17, [#allocation3], 128, 128, 8
    $region5: #{tpu_custom_call.1} parent=1 // pred_fallthru
      _
    // Predicated region
    $region6: #{tpu_custom_call.1} parent=1 // pred_check
      _
    $region7: #{tpu_custom_call.1} parent=1 // pred_check_branch
      %24 = sbr.rel (0) target = $region9
    $region8: #{tpu_custom_call.1} parent=1 // pred_region
      %s26 = ssub.s32 256, 256
      %27 = vsyncadd [#allocation6], %s26
      %s28 = sshll.u32 [#allocation5], 4
      %s29 = int_to_ptr.vmem [resolvable:$true] %s28
      %34 = dma.hbm_to_vmem [thread:$0]  %s1, 256, %s29, [#allocation6], 128, 128, 8
    $region9: #{tpu_custom_call.1} parent=1 // pred_fallthru
      _
    // Predicated region
    $region10: #{tpu_custom_call.1} parent=1 // pred_check
      _
    $region11: #{tpu_custom_call.1} parent=1 // pred_check_branch
      %36 = sbr.rel (0) target = $region13
    $region12: #{tpu_custom_call.1} parent=1 // pred_region
      %s38 = ssub.s32 2048, 2048
      %39 = vsyncadd [#allocation6], %s38
      %s40 = sshll.u32 [#allocation7], 4
      %s41 = int_to_ptr.vmem [resolvable:$true] %s40
      %46 = dma.hbm_to_vmem [thread:$0]  %s2, 2048, %s41, [#allocation6], 128, 128, 8
    $region13: #{tpu_custom_call.1} parent=1 // pred_fallthru
      _
    // Predicated region
    $region14: #{tpu_custom_call.1} parent=1 // pred_check
      _
    $region15: #{tpu_custom_call.1} parent=1 // pred_check_branch
      %48 = sbr.rel (0) target = $region17
    $region16: #{tpu_custom_call.1} parent=1 // pred_region
      %49 = dma.done [#allocation3], 256
    $region17: #{tpu_custom_call.1} parent=1 // pred_fallthru
      _
    // Predicated region
    $region18: #{tpu_custom_call.1} parent=1 // pred_check
      _
    $region19: #{tpu_custom_call.1} parent=1 // pred_check_branch
      %51 = sbr.rel (0) target = $region21
    $region20: #{tpu_custom_call.1} parent=1 // pred_region
      %52 = dma.done [#allocation6], 256
    $region21: #{tpu_custom_call.1} parent=1 // pred_fallthru
      _
    // Predicated region
    $region22: #{tpu_custom_call.1} parent=1 // pred_check
      _
    $region23: #{tpu_custom_call.1} parent=1 // pred_check_branch
      %54 = sbr.rel (0) target = $region25
    $region24: #{tpu_custom_call.1} parent=1 // pred_region
      %55 = dma.done [#allocation6], 2048
    $region25: #{tpu_custom_call.1} parent=1 // pred_fallthru
      _
    %v56 = vld [vmem:[#allocation2] sm:$0xff]
    %v57 = vld [vmem:[#allocation2 + $0x8] sm:$0xff]
    %v58 = vld [vmem:[#allocation5] sm:$0xff]
    %v59 = vld [vmem:[#allocation5 + $0x8] sm:$0xff]
    %vm60 = vcmask 130048
    %v62 = vsel %vm60, %v58, 0
    %v65 = vsel %vm60, %v59, 0
    %67 = vmatprep.subr.mxu0 0.0
    %v68 = vand.u32 %v56, 4294901760
    %69 = vmatpush1.msra.mxu0 %v68
    %70 = vmatprep.subr.mxu0 0.0
    %v71 = vand.u32 %v57, 4294901760
    %72 = vmatpush1.msra.mxu0 %v71
    %73 = vmatprep.subr.mxu0 0.0
    %74 = vmatpush1.msra.mxu0 0.0
    %75 = vmatprep.subr.mxu0 0.0
    %76 = vmatpush1.msra.mxu0 0.0
    %77 = vmatprep.subr.mxu0 0.0
    %78 = vmatpush1.msra.mxu0 0.0
    %79 = vmatprep.subr.mxu0 0.0
    %80 = vmatpush1.msra.mxu0 0.0
    %81 = vmatprep.subr.mxu0 0.0
    %82 = vmatpush1.msra.mxu0 0.0
    %83 = vmatprep.subr.mxu0 0.0
    %84 = vmatpush1.msra.mxu0 0.0
    %85 = vmatprep.subr.mxu0 0.0
    %86 = vmatpush1.msra.mxu0 0.0
    %87 = vmatprep.subr.mxu0 0.0
    %88 = vmatpush1.msra.mxu0 0.0
    %89 = vmatprep.subr.mxu0 0.0
    %90 = vmatpush1.msra.mxu0 0.0
    %91 = vmatprep.subr.mxu0 0.0
    %92 = vmatpush1.msra.mxu0 0.0
    %93 = vmatprep.subr.mxu0 0.0
    %94 = vmatpush1.msra.mxu0 0.0
    %95 = vmatprep.subr.mxu0 0.0
    %96 = vmatpush1.msra.mxu0 0.0
    %97 = vmatprep.subr.mxu0 0.0
    %98 = vmatpush1.msra.mxu0 0.0
    %99 = vmatprep.subr.mxu0 0.0
    %100 = vmatpush1.msra.mxu0 0.0
    %101 = vmatprep.subr.mxu0 0.0
    %102 = vmatpush1.msra.mxu0 0.0
    %103 = vmatprep.subr.mxu0 0.0
    %104 = vmatpush1.msra.mxu0 0.0
    %105 = vmatprep.subr.mxu0 0.0
    %106 = vmatpush1.msra.mxu0 0.0
    %107 = vmatprep.subr.mxu0 0.0
    %108 = vmatpush1.msra.mxu0 0.0
    %109 = vmatprep.subr.mxu0 0.0
    %110 = vmatpush1.msra.mxu0 0.0
    %111 = vmatprep.subr.mxu0 0.0
    %112 = vmatpush1.msra.mxu0 0.0
    %113 = vmatprep.subr.mxu0 0.0
    %114 = vmatpush1.msra.mxu0 0.0
    %115 = vmatprep.subr.mxu0 0.0
    %116 = vmatpush1.msra.mxu0 0.0
    %117 = vmatprep.subr.mxu0 0.0
    %118 = vmatpush1.msra.mxu0 0.0
    %119 = vmatprep.subr.mxu0 0.0
    %120 = vmatpush1.msra.mxu0 0.0
    %121 = vmatprep.subr.mxu0 0.0
    %122 = vmatpush1.msra.mxu0 0.0
    %123 = vmatprep.subr.mxu0 0.0
    %124 = vmatpush1.msra.mxu0 0.0
    %125 = vmatprep.subr.mxu0 0.0
    %126 = vmatpush1.msra.mxu0 0.0
    %127 = vmatprep.subr.mxu0 0.0
    %128 = vmatpush1.msra.mxu0 0.0
    %129 = vmatprep.subr.mxu0 0.0
    %130 = vmatpush1.msra.mxu0 0.0
    %131 = vmatprep.subr.mxu0 0.0
    %132 = vmatpush1.msra.mxu0 0.0
    %133 = vmatprep.mubr.f32.mxu0 0.0
    %v134 = vand.u32 %v62, 4294901760
    %v135 = vsub.f32 %v62, %v134
    %v136 = vand.u32 %v135, 4294901760
    %v137 = vsub.f32 %v135, %v136
    %v138 = vand.u32 %v137, 4294901760
    %139 = vmatmul.mubr.f32.gmra.mrb[0].mxu0 %v138
    %v140 = vpop.f32.mrb[0].mxu0
    %v141 = vadd.f32 0.0, %v140
    %v142 = vpop.f32.mrb[0].mxu0
    %143 = vmatprep.mubr.f32.mxu0 0.0
    %v144 = vand.u32 %v65, 4294901760
    %v145 = vsub.f32 %v65, %v144
    %v146 = vand.u32 %v145, 4294901760
    %v147 = vsub.f32 %v145, %v146
    %v148 = vand.u32 %v147, 4294901760
    %149 = vmatmul.mubr.f32.gmra.mrb[0].mxu0 %v148
    %v150 = vpop.f32.mrb[0].mxu0
    %v151 = vadd.f32 0.0, %v150
    %v152 = vpop.f32.mrb[0].mxu0
    %153 = vdwg.mxu0
    %154 = vmatprep.subr.mxu0 0.0
    %v155 = vand.u32 %v56, 4294901760
    %v156 = vsub.f32 %v56, %v155
    %v157 = vand.u32 %v156, 4294901760
    %v158 = vsub.f32 %v156, %v157
    %v159 = vand.u32 %v158, 4294901760
    %160 = vmatpush1.msra.mxu0 %v159
    %161 = vmatprep.subr.mxu0 0.0
    %v162 = vand.u32 %v57, 4294901760
    %v163 = vsub.f32 %v57, %v162
    %v164 = vand.u32 %v163, 4294901760
    %v165 = vsub.f32 %v163, %v164
    %v166 = vand.u32 %v165, 4294901760
    %167 = vmatpush1.msra.mxu0 %v166
    %168 = vmatprep.subr.mxu0 0.0
    %169 = vmatpush1.msra.mxu0 0.0
    %170 = vmatprep.subr.mxu0 0.0
    %171 = vmatpush1.msra.mxu0 0.0
    %172 = vmatprep.subr.mxu0 0.0
    %173 = vmatpush1.msra.mxu0 0.0
    %174 = vmatprep.subr.mxu0 0.0
    %175 = vmatpush1.msra.mxu0 0.0
    %176 = vmatprep.subr.mxu0 0.0
    %177 = vmatpush1.msra.mxu0 0.0
    %178 = vmatprep.subr.mxu0 0.0
    %179 = vmatpush1.msra.mxu0 0.0
    %180 = vmatprep.subr.mxu0 0.0
    %181 = vmatpush1.msra.mxu0 0.0
    %182 = vmatprep.subr.mxu0 0.0
    %183 = vmatpush1.msra.mxu0 0.0
    %184 = vmatprep.subr.mxu0 0.0
    %185 = vmatpush1.msra.mxu0 0.0
    %186 = vmatprep.subr.mxu0 0.0
    %187 = vmatpush1.msra.mxu0 0.0
    %188 = vmatprep.subr.mxu0 0.0
    %189 = vmatpush1.msra.mxu0 0.0
    %190 = vmatprep.subr.mxu0 0.0
    %191 = vmatpush1.msra.mxu0 0.0
    %192 = vmatprep.subr.mxu0 0.0
    %193 = vmatpush1.msra.mxu0 0.0
    %194 = vmatprep.subr.mxu0 0.0
    %195 = vmatpush1.msra.mxu0 0.0
    %196 = vmatprep.subr.mxu0 0.0
    %197 = vmatpush1.msra.mxu0 0.0
    %198 = vmatprep.subr.mxu0 0.0
    %199 = vmatpush1.msra.mxu0 0.0
    %200 = vmatprep.subr.mxu0 0.0
    %201 = vmatpush1.msra.mxu0 0.0
    %202 = vmatprep.subr.mxu0 0.0
    %203 = vmatpush1.msra.mxu0 0.0
    %204 = vmatprep.subr.mxu0 0.0
    %205 = vmatpush1.msra.mxu0 0.0
    %206 = vmatprep.subr.mxu0 0.0
    %207 = vmatpush1.msra.mxu0 0.0
    %208 = vmatprep.subr.mxu0 0.0
    %209 = vmatpush1.msra.mxu0 0.0
    %210 = vmatprep.subr.mxu0 0.0
    %211 = vmatpush1.msra.mxu0 0.0
    %212 = vmatprep.subr.mxu0 0.0
    %213 = vmatpush1.msra.mxu0 0.0
    %214 = vmatprep.subr.mxu0 0.0
    %215 = vmatpush1.msra.mxu0 0.0
    %216 = vmatprep.subr.mxu0 0.0
    %217 = vmatpush1.msra.mxu0 0.0
    %218 = vmatprep.subr.mxu0 0.0
    %219 = vmatpush1.msra.mxu0 0.0
    %220 = vmatprep.subr.mxu0 0.0
    %221 = vmatpush1.msra.mxu0 0.0
    %222 = vmatprep.subr.mxu0 0.0
    %223 = vmatpush1.msra.mxu0 0.0
    %224 = vmatprep.subr.mxu0 0.0
    %225 = vmatpush1.msra.mxu0 0.0
    %226 = vmatprep.subr.mxu0 0.0
    %227 = vmatpush1.msra.mxu0 0.0
    %228 = vmatprep.mubr.f32.mxu0 0.0
    %v229 = vand.u32 %v62, 4294901760
    %230 = vmatmul.mubr.f32.gmra.mrb[0].mxu0 %v229
    %v231 = vpop.f32.mrb[0].mxu0
    %v232 = vadd.f32 %v141, %v231
    %v233 = vpop.f32.mrb[0].mxu0
    %234 = vmatprep.mubr.f32.mxu0 0.0
    %v235 = vand.u32 %v65, 4294901760
    %236 = vmatmul.mubr.f32.gmra.mrb[0].mxu0 %v235
    %v237 = vpop.f32.mrb[0].mxu0
    %v238 = vadd.f32 %v151, %v237
    %v239 = vpop.f32.mrb[0].mxu0
    %240 = vdwg.mxu0
    %241 = vmatprep.subr.mxu0 0.0
    %v242 = vand.u32 %v56, 4294901760
    %v243 = vsub.f32 %v56, %v242
    %244 = vmatpush1.msra.mxu0 %v243
    %245 = vmatprep.subr.mxu0 0.0
    %v246 = vand.u32 %v57, 4294901760
    %v247 = vsub.f32 %v57, %v246
    %248 = vmatpush1.msra.mxu0 %v247
    %249 = vmatprep.subr.mxu0 0.0
    %250 = vmatpush1.msra.mxu0 0.0
    %251 = vmatprep.subr.mxu0 0.0
    %252 = vmatpush1.msra.mxu0 0.0
    %253 = vmatprep.subr.mxu0 0.0
    %254 = vmatpush1.msra.mxu0 0.0
    %255 = vmatprep.subr.mxu0 0.0
    %256 = vmatpush1.msra.mxu0 0.0
    %257 = vmatprep.subr.mxu0 0.0
    %258 = vmatpush1.msra.mxu0 0.0
    %259 = vmatprep.subr.mxu0 0.0
    %260 = vmatpush1.msra.mxu0 0.0
    %261 = vmatprep.subr.mxu0 0.0
    %262 = vmatpush1.msra.mxu0 0.0
    %263 = vmatprep.subr.mxu0 0.0
    %264 = vmatpush1.msra.mxu0 0.0
    %265 = vmatprep.subr.mxu0 0.0
    %266 = vmatpush1.msra.mxu0 0.0
    %267 = vmatprep.subr.mxu0 0.0
    %268 = vmatpush1.msra.mxu0 0.0
    %269 = vmatprep.subr.mxu0 0.0
    %270 = vmatpush1.msra.mxu0 0.0
    %271 = vmatprep.subr.mxu0 0.0
    %272 = vmatpush1.msra.mxu0 0.0
    %273 = vmatprep.subr.mxu0 0.0
    %274 = vmatpush1.msra.mxu0 0.0
    %275 = vmatprep.subr.mxu0 0.0
    %276 = vmatpush1.msra.mxu0 0.0
    %277 = vmatprep.subr.mxu0 0.0
    %278 = vmatpush1.msra.mxu0 0.0
    %279 = vmatprep.subr.mxu0 0.0
    %280 = vmatpush1.msra.mxu0 0.0
    %281 = vmatprep.subr.mxu0 0.0
    %282 = vmatpush1.msra.mxu0 0.0
    %283 = vmatprep.subr.mxu0 0.0
    %284 = vmatpush1.msra.mxu0 0.0
    %285 = vmatprep.subr.mxu0 0.0
    %286 = vmatpush1.msra.mxu0 0.0
    %287 = vmatprep.subr.mxu0 0.0
    %288 = vmatpush1.msra.mxu0 0.0
    %289 = vmatprep.subr.mxu0 0.0
    %290 = vmatpush1.msra.mxu0 0.0
    %291 = vmatprep.subr.mxu0 0.0
    %292 = vmatpush1.msra.mxu0 0.0
    %293 = vmatprep.subr.mxu0 0.0
    %294 = vmatpush1.msra.mxu0 0.0
    %295 = vmatprep.subr.mxu0 0.0
    %296 = vmatpush1.msra.mxu0 0.0
    %297 = vmatprep.subr.mxu0 0.0
    %298 = vmatpush1.msra.mxu0 0.0
    %299 = vmatprep.subr.mxu0 0.0
    %300 = vmatpush1.msra.mxu0 0.0
    %301 = vmatprep.subr.mxu0 0.0
    %302 = vmatpush1.msra.mxu0 0.0
    %303 = vmatprep.subr.mxu0 0.0
    %304 = vmatpush1.msra.mxu0 0.0
    %305 = vmatprep.subr.mxu0 0.0
    %306 = vmatpush1.msra.mxu0 0.0
    %307 = vmatprep.subr.mxu0 0.0
    %308 = vmatpush1.msra.mxu0 0.0
    %309 = vmatprep.mubr.f32.mxu0 0.0
    %v310 = vand.u32 %v62, 4294901760
    %v311 = vsub.f32 %v62, %v310
    %312 = vmatmul.mubr.f32.gmra.mrb[0].mxu0 %v311
    %v313 = vpop.f32.mrb[0].mxu0
    %v314 = vadd.f32 %v232, %v313
    %v315 = vpop.f32.mrb[0].mxu0
    %316 = vmatprep.mubr.f32.mxu0 0.0
    %v317 = vand.u32 %v65, 4294901760
    %v318 = vsub.f32 %v65, %v317
    %319 = vmatmul.mubr.f32.gmra.mrb[0].mxu0 %v318
    %v320 = vpop.f32.mrb[0].mxu0
    %v321 = vadd.f32 %v238, %v320
    %v322 = vpop.f32.mrb[0].mxu0
    %323 = vdwg.mxu0
    %324 = vmatprep.subr.mxu0 0.0
    %v325 = vand.u32 %v56, 4294901760
    %326 = vmatpush1.msra.mxu0 %v325
    %327 = vmatprep.subr.mxu0 0.0
    %v328 = vand.u32 %v57, 4294901760
    %329 = vmatpush1.msra.mxu0 %v328
    %330 = vmatprep.subr.mxu0 0.0
    %331 = vmatpush1.msra.mxu0 0.0
    %332 = vmatprep.subr.mxu0 0.0
    %333 = vmatpush1.msra.mxu0 0.0
    %334 = vmatprep.subr.mxu0 0.0
    %335 = vmatpush1.msra.mxu0 0.0
    %336 = vmatprep.subr.mxu0 0.0
    %337 = vmatpush1.msra.mxu0 0.0
    %338 = vmatprep.subr.mxu0 0.0
    %339 = vmatpush1.msra.mxu0 0.0
    %340 = vmatprep.subr.mxu0 0.0
    %341 = vmatpush1.msra.mxu0 0.0
    %342 = vmatprep.subr.mxu0 0.0
    %343 = vmatpush1.msra.mxu0 0.0
    %344 = vmatprep.subr.mxu0 0.0
    %345 = vmatpush1.msra.mxu0 0.0
    %346 = vmatprep.subr.mxu0 0.0
    %347 = vmatpush1.msra.mxu0 0.0
    %348 = vmatprep.subr.mxu0 0.0
    %349 = vmatpush1.msra.mxu0 0.0
    %350 = vmatprep.subr.mxu0 0.0
    %351 = vmatpush1.msra.mxu0 0.0
    %352 = vmatprep.subr.mxu0 0.0
    %353 = vmatpush1.msra.mxu0 0.0
    %354 = vmatprep.subr.mxu0 0.0
    %355 = vmatpush1.msra.mxu0 0.0
    %356 = vmatprep.subr.mxu0 0.0
    %357 = vmatpush1.msra.mxu0 0.0
    %358 = vmatprep.subr.mxu0 0.0
    %359 = vmatpush1.msra.mxu0 0.0
    %360 = vmatprep.subr.mxu0 0.0
    %361 = vmatpush1.msra.mxu0 0.0
    %362 = vmatprep.subr.mxu0 0.0
    %363 = vmatpush1.msra.mxu0 0.0
    %364 = vmatprep.subr.mxu0 0.0
    %365 = vmatpush1.msra.mxu0 0.0
    %366 = vmatprep.subr.mxu0 0.0
    %367 = vmatpush1.msra.mxu0 0.0
    %368 = vmatprep.subr.mxu0 0.0
    %369 = vmatpush1.msra.mxu0 0.0
    %370 = vmatprep.subr.mxu0 0.0
    %371 = vmatpush1.msra.mxu0 0.0
    %372 = vmatprep.subr.mxu0 0.0
    %373 = vmatpush1.msra.mxu0 0.0
    %374 = vmatprep.subr.mxu0 0.0
    %375 = vmatpush1.msra.mxu0 0.0
    %376 = vmatprep.subr.mxu0 0.0
    %377 = vmatpush1.msra.mxu0 0.0
    %378 = vmatprep.subr.mxu0 0.0
    %379 = vmatpush1.msra.mxu0 0.0
    %380 = vmatprep.subr.mxu0 0.0
    %381 = vmatpush1.msra.mxu0 0.0
    %382 = vmatprep.subr.mxu0 0.0
    %383 = vmatpush1.msra.mxu0 0.0
    %384 = vmatprep.subr.mxu0 0.0
    %385 = vmatpush1.msra.mxu0 0.0
    %386 = vmatprep.subr.mxu0 0.0
    %387 = vmatpush1.msra.mxu0 0.0
    %388 = vmatprep.subr.mxu0 0.0
    %389 = vmatpush1.msra.mxu0 0.0
    %390 = vmatprep.mubr.f32.mxu0 0.0
    %v391 = vand.u32 %v62, 4294901760
    %v392 = vsub.f32 %v62, %v391
    %v393 = vand.u32 %v392, 4294901760
    %394 = vmatmul.mubr.f32.gmra.mrb[0].mxu0 %v393
    %v395 = vpop.f32.mrb[0].mxu0
    %v396 = vadd.f32 %v314, %v395
    %v397 = vpop.f32.mrb[0].mxu0
    %398 = vmatprep.mubr.f32.mxu0 0.0
    %v399 = vand.u32 %v65, 4294901760
    %v400 = vsub.f32 %v65, %v399
    %v401 = vand.u32 %v400, 4294901760
    %402 = vmatmul.mubr.f32.gmra.mrb[0].mxu0 %v401
    %v403 = vpop.f32.mrb[0].mxu0
    %v404 = vadd.f32 %v321, %v403
    %v405 = vpop.f32.mrb[0].mxu0
    %406 = vdwg.mxu0
    %407 = vmatprep.subr.mxu0 0.0
    %v408 = vand.u32 %v56, 4294901760
    %v409 = vsub.f32 %v56, %v408
    %v410 = vand.u32 %v409, 4294901760
    %411 = vmatpush1.msra.mxu0 %v410
    %412 = vmatprep.subr.mxu0 0.0
    %v413 = vand.u32 %v57, 4294901760
    %v414 = vsub.f32 %v57, %v413
    %v415 = vand.u32 %v414, 4294901760
    %416 = vmatpush1.msra.mxu0 %v415
    %417 = vmatprep.subr.mxu0 0.0
    %418 = vmatpush1.msra.mxu0 0.0
    %419 = vmatprep.subr.mxu0 0.0
    %420 = vmatpush1.msra.mxu0 0.0
    %421 = vmatprep.subr.mxu0 0.0
    %422 = vmatpush1.msra.mxu0 0.0
    %423 = vmatprep.subr.mxu0 0.0
    %424 = vmatpush1.msra.mxu0 0.0
    %425 = vmatprep.subr.mxu0 0.0
    %426 = vmatpush1.msra.mxu0 0.0
    %427 = vmatprep.subr.mxu0 0.0
    %428 = vmatpush1.msra.mxu0 0.0
    %429 = vmatprep.subr.mxu0 0.0
    %430 = vmatpush1.msra.mxu0 0.0
    %431 = vmatprep.subr.mxu0 0.0
    %432 = vmatpush1.msra.mxu0 0.0
    %433 = vmatprep.subr.mxu0 0.0
    %434 = vmatpush1.msra.mxu0 0.0
    %435 = vmatprep.subr.mxu0 0.0
    %436 = vmatpush1.msra.mxu0 0.0
    %437 = vmatprep.subr.mxu0 0.0
    %438 = vmatpush1.msra.mxu0 0.0
    %439 = vmatprep.subr.mxu0 0.0
    %440 = vmatpush1.msra.mxu0 0.0
    %441 = vmatprep.subr.mxu0 0.0
    %442 = vmatpush1.msra.mxu0 0.0
    %443 = vmatprep.subr.mxu0 0.0
    %444 = vmatpush1.msra.mxu0 0.0
    %445 = vmatprep.subr.mxu0 0.0
    %446 = vmatpush1.msra.mxu0 0.0
    %447 = vmatprep.subr.mxu0 0.0
    %448 = vmatpush1.msra.mxu0 0.0
    %449 = vmatprep.subr.mxu0 0.0
    %450 = vmatpush1.msra.mxu0 0.0
    %451 = vmatprep.subr.mxu0 0.0
    %452 = vmatpush1.msra.mxu0 0.0
    %453 = vmatprep.subr.mxu0 0.0
    %454 = vmatpush1.msra.mxu0 0.0
    %455 = vmatprep.subr.mxu0 0.0
    %456 = vmatpush1.msra.mxu0 0.0
    %457 = vmatprep.subr.mxu0 0.0
    %458 = vmatpush1.msra.mxu0 0.0
    %459 = vmatprep.subr.mxu0 0.0
    %460 = vmatpush1.msra.mxu0 0.0
    %461 = vmatprep.subr.mxu0 0.0
    %462 = vmatpush1.msra.mxu0 0.0
    %463 = vmatprep.subr.mxu0 0.0
    %464 = vmatpush1.msra.mxu0 0.0
    %465 = vmatprep.subr.mxu0 0.0
    %466 = vmatpush1.msra.mxu0 0.0
    %467 = vmatprep.subr.mxu0 0.0
    %468 = vmatpush1.msra.mxu0 0.0
    %469 = vmatprep.subr.mxu0 0.0
    %470 = vmatpush1.msra.mxu0 0.0
    %471 = vmatprep.subr.mxu0 0.0
    %472 = vmatpush1.msra.mxu0 0.0
    %473 = vmatprep.subr.mxu0 0.0
    %474 = vmatpush1.msra.mxu0 0.0
    %475 = vmatprep.subr.mxu0 0.0
    %476 = vmatpush1.msra.mxu0 0.0
    %477 = vmatprep.mubr.f32.mxu0 0.0
    %v478 = vand.u32 %v62, 4294901760
    %479 = vmatmul.mubr.f32.gmra.mrb[0].mxu0 %v478
    %v480 = vpop.f32.mrb[0].mxu0
    %v481 = vadd.f32 %v396, %v480
    %v482 = vpop.f32.mrb[0].mxu0
    %483 = vmatprep.mubr.f32.mxu0 0.0
    %v484 = vand.u32 %v65, 4294901760
    %485 = vmatmul.mubr.f32.gmra.mrb[0].mxu0 %v484
    %v486 = vpop.f32.mrb[0].mxu0
    %v487 = vadd.f32 %v404, %v486
    %v488 = vpop.f32.mrb[0].mxu0
    %489 = vdwg.mxu0
    %490 = vmatprep.subr.mxu0 0.0
    %v491 = vand.u32 %v56, 4294901760
    %492 = vmatpush1.msra.mxu0 %v491
    %493 = vmatprep.subr.mxu0 0.0
    %v494 = vand.u32 %v57, 4294901760
    %495 = vmatpush1.msra.mxu0 %v494
    %496 = vmatprep.subr.mxu0 0.0
    %497 = vmatpush1.msra.mxu0 0.0
    %498 = vmatprep.subr.mxu0 0.0
    %499 = vmatpush1.msra.mxu0 0.0
    %500 = vmatprep.subr.mxu0 0.0
    %501 = vmatpush1.msra.mxu0 0.0
    %502 = vmatprep.subr.mxu0 0.0
    %503 = vmatpush1.msra.mxu0 0.0
    %504 = vmatprep.subr.mxu0 0.0
    %505 = vmatpush1.msra.mxu0 0.0
    %506 = vmatprep.subr.mxu0 0.0
    %507 = vmatpush1.msra.mxu0 0.0
    %508 = vmatprep.subr.mxu0 0.0
    %509 = vmatpush1.msra.mxu0 0.0
    %510 = vmatprep.subr.mxu0 0.0
    %511 = vmatpush1.msra.mxu0 0.0
    %512 = vmatprep.subr.mxu0 0.0
    %513 = vmatpush1.msra.mxu0 0.0
    %514 = vmatprep.subr.mxu0 0.0
    %515 = vmatpush1.msra.mxu0 0.0
    %516 = vmatprep.subr.mxu0 0.0
    %517 = vmatpush1.msra.mxu0 0.0
    %518 = vmatprep.subr.mxu0 0.0
    %519 = vmatpush1.msra.mxu0 0.0
    %520 = vmatprep.subr.mxu0 0.0
    %521 = vmatpush1.msra.mxu0 0.0
    %522 = vmatprep.subr.mxu0 0.0
    %523 = vmatpush1.msra.mxu0 0.0
    %524 = vmatprep.subr.mxu0 0.0
    %525 = vmatpush1.msra.mxu0 0.0
    %526 = vmatprep.subr.mxu0 0.0
    %527 = vmatpush1.msra.mxu0 0.0
    %528 = vmatprep.subr.mxu0 0.0
    %529 = vmatpush1.msra.mxu0 0.0
    %530 = vmatprep.subr.mxu0 0.0
    %531 = vmatpush1.msra.mxu0 0.0
    %532 = vmatprep.subr.mxu0 0.0
    %533 = vmatpush1.msra.mxu0 0.0
    %534 = vmatprep.subr.mxu0 0.0
    %535 = vmatpush1.msra.mxu0 0.0
    %536 = vmatprep.subr.mxu0 0.0
    %537 = vmatpush1.msra.mxu0 0.0
    %538 = vmatprep.subr.mxu0 0.0
    %539 = vmatpush1.msra.mxu0 0.0
    %540 = vmatprep.subr.mxu0 0.0
    %541 = vmatpush1.msra.mxu0 0.0
    %542 = vmatprep.subr.mxu0 0.0
    %543 = vmatpush1.msra.mxu0 0.0
    %544 = vmatprep.subr.mxu0 0.0
    %545 = vmatpush1.msra.mxu0 0.0
    %546 = vmatprep.subr.mxu0 0.0
    %547 = vmatpush1.msra.mxu0 0.0
    %548 = vmatprep.subr.mxu0 0.0
    %549 = vmatpush1.msra.mxu0 0.0
    %550 = vmatprep.subr.mxu0 0.0
    %551 = vmatpush1.msra.mxu0 0.0
    %552 = vmatprep.subr.mxu0 0.0
    %553 = vmatpush1.msra.mxu0 0.0
    %554 = vmatprep.subr.mxu0 0.0
    %555 = vmatpush1.msra.mxu0 0.0
    %556 = vmatprep.mubr.f32.mxu0 0.0
    %v557 = vand.u32 %v62, 4294901760
    %558 = vmatmul.mubr.f32.gmra.mrb[0].mxu0 %v557
    %v559 = vpop.f32.mrb[0].mxu0
    %v560 = vadd.f32 %v481, %v559
    %v561 = vpop.f32.mrb[0].mxu0
    %562 = vmatprep.mubr.f32.mxu0 0.0
    %v563 = vand.u32 %v65, 4294901760
    %564 = vmatmul.mubr.f32.gmra.mrb[0].mxu0 %v563
    %v565 = vpop.f32.mrb[0].mxu0
    %v566 = vadd.f32 %v487, %v565
    %v567 = vpop.f32.mrb[0].mxu0
    %568 = vdwg.mxu0
    %v569 = vld [vmem:[#allocation7] sm:$0xff]
    %v570 = vld [vmem:[#allocation7 + $0x8] sm:$0xff]
    %v571 = vld [vmem:[#allocation7 + $0x10] sm:$0xff]
    %v572 = vld [vmem:[#allocation7 + $0x18] sm:$0xff]
    %v573 = vld [vmem:[#allocation7 + $0x20] sm:$0xff]
    %v574 = vld [vmem:[#allocation7 + $0x28] sm:$0xff]
    %v575 = vld [vmem:[#allocation7 + $0x30] sm:$0xff]
    %v576 = vld [vmem:[#allocation7 + $0x38] sm:$0xff]
    %v577 = vld [vmem:[#allocation7 + $0x40] sm:$0xff]
    %v578 = vld [vmem:[#allocation7 + $0x48] sm:$0xff]
    %v579 = vld [vmem:[#allocation7 + $0x50] sm:$0xff]
    %v580 = vld [vmem:[#allocation7 + $0x58] sm:$0xff]
    %v581 = vld [vmem:[#allocation7 + $0x60] sm:$0xff]
    %v582 = vld [vmem:[#allocation7 + $0x68] sm:$0xff]
    %v583 = vld [vmem:[#allocation7 + $0x70] sm:$0xff]
    %v584 = vld [vmem:[#allocation7 + $0x78] sm:$0xff]
    %585 = vmatprep.subr.mxu0 0.0
    %v586 = vand.u32 %v569, 4294901760
    %587 = vmatpush1.msra.mxu0 %v586
    %588 = vmatprep.subr.mxu0 0.0
    %v589 = vand.u32 %v570, 4294901760
    %590 = vmatpush1.msra.mxu0 %v589
    %591 = vmatprep.subr.mxu0 0.0
    %v592 = vand.u32 %v571, 4294901760
    %593 = vmatpush1.msra.mxu0 %v592
    %594 = vmatprep.subr.mxu0 0.0
    %v595 = vand.u32 %v572, 4294901760
    %596 = vmatpush1.msra.mxu0 %v595
    %597 = vmatprep.subr.mxu0 0.0
    %v598 = vand.u32 %v573, 4294901760
    %599 = vmatpush1.msra.mxu0 %v598
    %600 = vmatprep.subr.mxu0 0.0
    %v601 = vand.u32 %v574, 4294901760
    %602 = vmatpush1.msra.mxu0 %v601
    %603 = vmatprep.subr.mxu0 0.0
    %v604 = vand.u32 %v575, 4294901760
    %605 = vmatpush1.msra.mxu0 %v604
    %606 = vmatprep.subr.mxu0 0.0
    %v607 = vand.u32 %v576, 4294901760
    %608 = vmatpush1.msra.mxu0 %v607
    %609 = vmatprep.subr.mxu0 0.0
    %v610 = vand.u32 %v577, 4294901760
    %611 = vmatpush1.msra.mxu0 %v610
    %612 = vmatprep.subr.mxu0 0.0
    %v613 = vand.u32 %v578, 4294901760
    %614 = vmatpush1.msra.mxu0 %v613
    %615 = vmatprep.subr.mxu0 0.0
    %v616 = vand.u32 %v579, 4294901760
    %617 = vmatpush1.msra.mxu0 %v616
    %618 = vmatprep.subr.mxu0 0.0
    %v619 = vand.u32 %v580, 4294901760
    %620 = vmatpush1.msra.mxu0 %v619
    %621 = vmatprep.subr.mxu0 0.0
    %v622 = vand.u32 %v581, 4294901760
    %623 = vmatpush1.msra.mxu0 %v622
    %624 = vmatprep.subr.mxu0 0.0
    %v625 = vand.u32 %v582, 4294901760
    %626 = vmatpush1.msra.mxu0 %v625
    %627 = vmatprep.subr.mxu0 0.0
    %v628 = vand.u32 %v583, 4294901760
    %629 = vmatpush1.msra.mxu0 %v628
    %630 = vmatprep.subr.mxu0 0.0
    %v631 = vand.u32 %v584, 4294901760
    %632 = vmatpush1.msra.mxu0 %v631
    %633 = vmatprep.subr.mxu0 0.0
    %634 = vmatpush1.msra.mxu0 0.0
    %635 = vmatprep.subr.mxu0 0.0
    %636 = vmatpush1.msra.mxu0 0.0
    %637 = vmatprep.subr.mxu0 0.0
    %638 = vmatpush1.msra.mxu0 0.0
    %639 = vmatprep.subr.mxu0 0.0
    %640 = vmatpush1.msra.mxu0 0.0
    %641 = vmatprep.subr.mxu0 0.0
    %642 = vmatpush1.msra.mxu0 0.0
    %643 = vmatprep.subr.mxu0 0.0
    %644 = vmatpush1.msra.mxu0 0.0
    %645 = vmatprep.subr.mxu0 0.0
    %646 = vmatpush1.msra.mxu0 0.0
    %647 = vmatprep.subr.mxu0 0.0
    %648 = vmatpush1.msra.mxu0 0.0
    %649 = vmatprep.subr.mxu0 0.0
    %650 = vmatpush1.msra.mxu0 0.0
    %651 = vmatprep.subr.mxu0 0.0
    %652 = vmatpush1.msra.mxu0 0.0
    %653 = vmatprep.subr.mxu0 0.0
    %654 = vmatpush1.msra.mxu0 0.0
    %655 = vmatprep.subr.mxu0 0.0
    %656 = vmatpush1.msra.mxu0 0.0
    %657 = vmatprep.subr.mxu0 0.0
    %658 = vmatpush1.msra.mxu0 0.0
    %659 = vmatprep.subr.mxu0 0.0
    %660 = vmatpush1.msra.mxu0 0.0
    %661 = vmatprep.subr.mxu0 0.0
    %662 = vmatpush1.msra.mxu0 0.0
    %663 = vmatprep.subr.mxu0 0.0
    %664 = vmatpush1.msra.mxu0 0.0
    %665 = vmatprep.mubr.f32.mxu0 0.0
    %v666 = vand.u32 %v560, 4294901760
    %v667 = vsub.f32 %v560, %v666
    %v668 = vand.u32 %v667, 4294901760
    %v669 = vsub.f32 %v667, %v668
    %v670 = vand.u32 %v669, 4294901760
    %671 = vmatmul.mubr.f32.gmra.mrb[0].mxu0 %v670
    %v672 = vpop.f32.mrb[0].mxu0
    %v673 = vadd.f32 0.0, %v672
    %v674 = vpop.f32.mrb[0].mxu0
    %675 = vmatprep.mubr.f32.mxu0 0.0
    %v676 = vand.u32 %v566, 4294901760
    %v677 = vsub.f32 %v566, %v676
    %v678 = vand.u32 %v677, 4294901760
    %v679 = vsub.f32 %v677, %v678
    %v680 = vand.u32 %v679, 4294901760
    %681 = vmatmul.mubr.f32.gmra.mrb[0].mxu0 %v680
    %v682 = vpop.f32.mrb[0].mxu0
    %v683 = vadd.f32 0.0, %v682
    %v684 = vpop.f32.mrb[0].mxu0
    %685 = vdwg.mxu0
    %686 = vmatprep.subr.mxu0 0.0
    %v687 = vand.u32 %v569, 4294901760
    %v688 = vsub.f32 %v569, %v687
    %v689 = vand.u32 %v688, 4294901760
    %v690 = vsub.f32 %v688, %v689
    %v691 = vand.u32 %v690, 4294901760
    %692 = vmatpush1.msra.mxu0 %v691
    %693 = vmatprep.subr.mxu0 0.0
    %v694 = vand.u32 %v570, 4294901760
    %v695 = vsub.f32 %v570, %v694
    %v696 = vand.u32 %v695, 4294901760
    %v697 = vsub.f32 %v695, %v696
    %v698 = vand.u32 %v697, 4294901760
    %699 = vmatpush1.msra.mxu0 %v698
    %700 = vmatprep.subr.mxu0 0.0
    %v701 = vand.u32 %v571, 4294901760
    %v702 = vsub.f32 %v571, %v701
    %v703 = vand.u32 %v702, 4294901760
    %v704 = vsub.f32 %v702, %v703
    %v705 = vand.u32 %v704, 4294901760
    %706 = vmatpush1.msra.mxu0 %v705
    %707 = vmatprep.subr.mxu0 0.0
    %v708 = vand.u32 %v572, 4294901760
    %v709 = vsub.f32 %v572, %v708
    %v710 = vand.u32 %v709, 4294901760
    %v711 = vsub.f32 %v709, %v710
    %v712 = vand.u32 %v711, 4294901760
    %713 = vmatpush1.msra.mxu0 %v712
    %714 = vmatprep.subr.mxu0 0.0
    %v715 = vand.u32 %v573, 4294901760
    %v716 = vsub.f32 %v573, %v715
    %v717 = vand.u32 %v716, 4294901760
    %v718 = vsub.f32 %v716, %v717
    %v719 = vand.u32 %v718, 4294901760
    %720 = vmatpush1.msra.mxu0 %v719
    %721 = vmatprep.subr.mxu0 0.0
    %v722 = vand.u32 %v574, 4294901760
    %v723 = vsub.f32 %v574, %v722
    %v724 = vand.u32 %v723, 4294901760
    %v725 = vsub.f32 %v723, %v724
    %v726 = vand.u32 %v725, 4294901760
    %727 = vmatpush1.msra.mxu0 %v726
    %728 = vmatprep.subr.mxu0 0.0
    %v729 = vand.u32 %v575, 4294901760
    %v730 = vsub.f32 %v575, %v729
    %v731 = vand.u32 %v730, 4294901760
    %v732 = vsub.f32 %v730, %v731
    %v733 = vand.u32 %v732, 4294901760
    %734 = vmatpush1.msra.mxu0 %v733
    %735 = vmatprep.subr.mxu0 0.0
    %v736 = vand.u32 %v576, 4294901760
    %v737 = vsub.f32 %v576, %v736
    %v738 = vand.u32 %v737, 4294901760
    %v739 = vsub.f32 %v737, %v738
    %v740 = vand.u32 %v739, 4294901760
    %741 = vmatpush1.msra.mxu0 %v740
    %742 = vmatprep.subr.mxu0 0.0
    %v743 = vand.u32 %v577, 4294901760
    %v744 = vsub.f32 %v577, %v743
    %v745 = vand.u32 %v744, 4294901760
    %v746 = vsub.f32 %v744, %v745
    %v747 = vand.u32 %v746, 4294901760
    %748 = vmatpush1.msra.mxu0 %v747
    %749 = vmatprep.subr.mxu0 0.0
    %v750 = vand.u32 %v578, 4294901760
    %v751 = vsub.f32 %v578, %v750
    %v752 = vand.u32 %v751, 4294901760
    %v753 = vsub.f32 %v751, %v752
    %v754 = vand.u32 %v753, 4294901760
    %755 = vmatpush1.msra.mxu0 %v754
    %756 = vmatprep.subr.mxu0 0.0
    %v757 = vand.u32 %v579, 4294901760
    %v758 = vsub.f32 %v579, %v757
    %v759 = vand.u32 %v758, 4294901760
    %v760 = vsub.f32 %v758, %v759
    %v761 = vand.u32 %v760, 4294901760
    %762 = vmatpush1.msra.mxu0 %v761
    %763 = vmatprep.subr.mxu0 0.0
    %v764 = vand.u32 %v580, 4294901760
    %v765 = vsub.f32 %v580, %v764
    %v766 = vand.u32 %v765, 4294901760
    %v767 = vsub.f32 %v765, %v766
    %v768 = vand.u32 %v767, 4294901760
    %769 = vmatpush1.msra.mxu0 %v768
    %770 = vmatprep.subr.mxu0 0.0
    %v771 = vand.u32 %v581, 4294901760
    %v772 = vsub.f32 %v581, %v771
    %v773 = vand.u32 %v772, 4294901760
    %v774 = vsub.f32 %v772, %v773
    %v775 = vand.u32 %v774, 4294901760
    %776 = vmatpush1.msra.mxu0 %v775
    %777 = vmatprep.subr.mxu0 0.0
    %v778 = vand.u32 %v582, 4294901760
    %v779 = vsub.f32 %v582, %v778
    %v780 = vand.u32 %v779, 4294901760
    %v781 = vsub.f32 %v779, %v780
    %v782 = vand.u32 %v781, 4294901760
    %783 = vmatpush1.msra.mxu0 %v782
    %784 = vmatprep.subr.mxu0 0.0
    %v785 = vand.u32 %v583, 4294901760
    %v786 = vsub.f32 %v583, %v785
    %v787 = vand.u32 %v786, 4294901760
    %v788 = vsub.f32 %v786, %v787
    %v789 = vand.u32 %v788, 4294901760
    %790 = vmatpush1.msra.mxu0 %v789
    %791 = vmatprep.subr.mxu0 0.0
    %v792 = vand.u32 %v584, 4294901760
    %v793 = vsub.f32 %v584, %v792
    %v794 = vand.u32 %v793, 4294901760
    %v795 = vsub.f32 %v793, %v794
    %v796 = vand.u32 %v795, 4294901760
    %797 = vmatpush1.msra.mxu0 %v796
    %798 = vmatprep.subr.mxu0 0.0
    %799 = vmatpush1.msra.mxu0 0.0
    %800 = vmatprep.subr.mxu0 0.0
    %801 = vmatpush1.msra.mxu0 0.0
    %802 = vmatprep.subr.mxu0 0.0
    %803 = vmatpush1.msra.mxu0 0.0
    %804 = vmatprep.subr.mxu0 0.0
    %805 = vmatpush1.msra.mxu0 0.0
    %806 = vmatprep.subr.mxu0 0.0
    %807 = vmatpush1.msra.mxu0 0.0
    %808 = vmatprep.subr.mxu0 0.0
    %809 = vmatpush1.msra.mxu0 0.0
    %810 = vmatprep.subr.mxu0 0.0
    %811 = vmatpush1.msra.mxu0 0.0
    %812 = vmatprep.subr.mxu0 0.0
    %813 = vmatpush1.msra.mxu0 0.0
    %814 = vmatprep.subr.mxu0 0.0
    %815 = vmatpush1.msra.mxu0 0.0
    %816 = vmatprep.subr.mxu0 0.0
    %817 = vmatpush1.msra.mxu0 0.0
    %818 = vmatprep.subr.mxu0 0.0
    %819 = vmatpush1.msra.mxu0 0.0
    %820 = vmatprep.subr.mxu0 0.0
    %821 = vmatpush1.msra.mxu0 0.0
    %822 = vmatprep.subr.mxu0 0.0
    %823 = vmatpush1.msra.mxu0 0.0
    %824 = vmatprep.subr.mxu0 0.0
    %825 = vmatpush1.msra.mxu0 0.0
    %826 = vmatprep.subr.mxu0 0.0
    %827 = vmatpush1.msra.mxu0 0.0
    %828 = vmatprep.subr.mxu0 0.0
    %829 = vmatpush1.msra.mxu0 0.0
    %830 = vmatprep.mubr.f32.mxu0 0.0
    %v831 = vand.u32 %v560, 4294901760
    %832 = vmatmul.mubr.f32.gmra.mrb[0].mxu0 %v831
    %v833 = vpop.f32.mrb[0].mxu0
    %v834 = vadd.f32 %v673, %v833
    %v835 = vpop.f32.mrb[0].mxu0
    %836 = vmatprep.mubr.f32.mxu0 0.0
    %v837 = vand.u32 %v566, 4294901760
    %838 = vmatmul.mubr.f32.gmra.mrb[0].mxu0 %v837
    %v839 = vpop.f32.mrb[0].mxu0
    %v840 = vadd.f32 %v683, %v839
    %v841 = vpop.f32.mrb[0].mxu0
    %842 = vdwg.mxu0
    %843 = vmatprep.subr.mxu0 0.0
    %v844 = vand.u32 %v569, 4294901760
    %v845 = vsub.f32 %v569, %v844
    %846 = vmatpush1.msra.mxu0 %v845
    %847 = vmatprep.subr.mxu0 0.0
    %v848 = vand.u32 %v570, 4294901760
    %v849 = vsub.f32 %v570, %v848
    %850 = vmatpush1.msra.mxu0 %v849
    %851 = vmatprep.subr.mxu0 0.0
    %v852 = vand.u32 %v571, 4294901760
    %v853 = vsub.f32 %v571, %v852
    %854 = vmatpush1.msra.mxu0 %v853
    %855 = vmatprep.subr.mxu0 0.0
    %v856 = vand.u32 %v572, 4294901760
    %v857 = vsub.f32 %v572, %v856
    %858 = vmatpush1.msra.mxu0 %v857
    %859 = vmatprep.subr.mxu0 0.0
    %v860 = vand.u32 %v573, 4294901760
    %v861 = vsub.f32 %v573, %v860
    %862 = vmatpush1.msra.mxu0 %v861
    %863 = vmatprep.subr.mxu0 0.0
    %v864 = vand.u32 %v574, 4294901760
    %v865 = vsub.f32 %v574, %v864
    %866 = vmatpush1.msra.mxu0 %v865
    %867 = vmatprep.subr.mxu0 0.0
    %v868 = vand.u32 %v575, 4294901760
    %v869 = vsub.f32 %v575, %v868
    %870 = vmatpush1.msra.mxu0 %v869
    %871 = vmatprep.subr.mxu0 0.0
    %v872 = vand.u32 %v576, 4294901760
    %v873 = vsub.f32 %v576, %v872
    %874 = vmatpush1.msra.mxu0 %v873
    %875 = vmatprep.subr.mxu0 0.0
    %v876 = vand.u32 %v577, 4294901760
    %v877 = vsub.f32 %v577, %v876
    %878 = vmatpush1.msra.mxu0 %v877
    %879 = vmatprep.subr.mxu0 0.0
    %v880 = vand.u32 %v578, 4294901760
    %v881 = vsub.f32 %v578, %v880
    %882 = vmatpush1.msra.mxu0 %v881
    %883 = vmatprep.subr.mxu0 0.0
    %v884 = vand.u32 %v579, 4294901760
    %v885 = vsub.f32 %v579, %v884
    %886 = vmatpush1.msra.mxu0 %v885
    %887 = vmatprep.subr.mxu0 0.0
    %v888 = vand.u32 %v580, 4294901760
    %v889 = vsub.f32 %v580, %v888
    %890 = vmatpush1.msra.mxu0 %v889
    %891 = vmatprep.subr.mxu0 0.0
    %v892 = vand.u32 %v581, 4294901760
    %v893 = vsub.f32 %v581, %v892
    %894 = vmatpush1.msra.mxu0 %v893
    %895 = vmatprep.subr.mxu0 0.0
    %v896 = vand.u32 %v582, 4294901760
    %v897 = vsub.f32 %v582, %v896
    %898 = vmatpush1.msra.mxu0 %v897
    %899 = vmatprep.subr.mxu0 0.0
    %v900 = vand.u32 %v583, 4294901760
    %v901 = vsub.f32 %v583, %v900
    %902 = vmatpush1.msra.mxu0 %v901
    %903 = vmatprep.subr.mxu0 0.0
    %v904 = vand.u32 %v584, 4294901760
    %v905 = vsub.f32 %v584, %v904
    %906 = vmatpush1.msra.mxu0 %v905
    %907 = vmatprep.subr.mxu0 0.0
    %908 = vmatpush1.msra.mxu0 0.0
    %909 = vmatprep.subr.mxu0 0.0
    %910 = vmatpush1.msra.mxu0 0.0
    %911 = vmatprep.subr.mxu0 0.0
    %912 = vmatpush1.msra.mxu0 0.0
    %913 = vmatprep.subr.mxu0 0.0
    %914 = vmatpush1.msra.mxu0 0.0
    %915 = vmatprep.subr.mxu0 0.0
    %916 = vmatpush1.msra.mxu0 0.0
    %917 = vmatprep.subr.mxu0 0.0
    %918 = vmatpush1.msra.mxu0 0.0
    %919 = vmatprep.subr.mxu0 0.0
    %920 = vmatpush1.msra.mxu0 0.0
    %921 = vmatprep.subr.mxu0 0.0
    %922 = vmatpush1.msra.mxu0 0.0
    %923 = vmatprep.subr.mxu0 0.0
    %924 = vmatpush1.msra.mxu0 0.0
    %925 = vmatprep.subr.mxu0 0.0
    %926 = vmatpush1.msra.mxu0 0.0
    %927 = vmatprep.subr.mxu0 0.0
    %928 = vmatpush1.msra.mxu0 0.0
    %929 = vmatprep.subr.mxu0 0.0
    %930 = vmatpush1.msra.mxu0 0.0
    %931 = vmatprep.subr.mxu0 0.0
    %932 = vmatpush1.msra.mxu0 0.0
    %933 = vmatprep.subr.mxu0 0.0
    %934 = vmatpush1.msra.mxu0 0.0
    %935 = vmatprep.subr.mxu0 0.0
    %936 = vmatpush1.msra.mxu0 0.0
    %937 = vmatprep.subr.mxu0 0.0
    %938 = vmatpush1.msra.mxu0 0.0
    %939 = vmatprep.mubr.f32.mxu0 0.0
    %v940 = vand.u32 %v560, 4294901760
    %v941 = vsub.f32 %v560, %v940
    %942 = vmatmul.mubr.f32.gmra.mrb[0].mxu0 %v941
    %v943 = vpop.f32.mrb[0].mxu0
    %v944 = vadd.f32 %v834, %v943
    %v945 = vpop.f32.mrb[0].mxu0
    %946 = vmatprep.mubr.f32.mxu0 0.0
    %v947 = vand.u32 %v566, 4294901760
    %v948 = vsub.f32 %v566, %v947
    %949 = vmatmul.mubr.f32.gmra.mrb[0].mxu0 %v948
    %v950 = vpop.f32.mrb[0].mxu0
    %v951 = vadd.f32 %v840, %v950
    %v952 = vpop.f32.mrb[0].mxu0
    %953 = vdwg.mxu0
    %954 = vmatprep.subr.mxu0 0.0
    %v955 = vand.u32 %v569, 4294901760
    %956 = vmatpush1.msra.mxu0 %v955
    %957 = vmatprep.subr.mxu0 0.0
    %v958 = vand.u32 %v570, 4294901760
    %959 = vmatpush1.msra.mxu0 %v958
    %960 = vmatprep.subr.mxu0 0.0
    %v961 = vand.u32 %v571, 4294901760
    %962 = vmatpush1.msra.mxu0 %v961
    %963 = vmatprep.subr.mxu0 0.0
    %v964 = vand.u32 %v572, 4294901760
    %965 = vmatpush1.msra.mxu0 %v964
    %966 = vmatprep.subr.mxu0 0.0
    %v967 = vand.u32 %v573, 4294901760
    %968 = vmatpush1.msra.mxu0 %v967
    %969 = vmatprep.subr.mxu0 0.0
    %v970 = vand.u32 %v574, 4294901760
    %971 = vmatpush1.msra.mxu0 %v970
    %972 = vmatprep.subr.mxu0 0.0
    %v973 = vand.u32 %v575, 4294901760
    %974 = vmatpush1.msra.mxu0 %v973
    %975 = vmatprep.subr.mxu0 0.0
    %v976 = vand.u32 %v576, 4294901760
    %977 = vmatpush1.msra.mxu0 %v976
    %978 = vmatprep.subr.mxu0 0.0
    %v979 = vand.u32 %v577, 4294901760
    %980 = vmatpush1.msra.mxu0 %v979
    %981 = vmatprep.subr.mxu0 0.0
    %v982 = vand.u32 %v578, 4294901760
    %983 = vmatpush1.msra.mxu0 %v982
    %984 = vmatprep.subr.mxu0 0.0
    %v985 = vand.u32 %v579, 4294901760
    %986 = vmatpush1.msra.mxu0 %v985
    %987 = vmatprep.subr.mxu0 0.0
    %v988 = vand.u32 %v580, 4294901760
    %989 = vmatpush1.msra.mxu0 %v988
    %990 = vmatprep.subr.mxu0 0.0
    %v991 = vand.u32 %v581, 4294901760
    %992 = vmatpush1.msra.mxu0 %v991
    %993 = vmatprep.subr.mxu0 0.0
    %v994 = vand.u32 %v582, 4294901760
    %995 = vmatpush1.msra.mxu0 %v994
    %996 = vmatprep.subr.mxu0 0.0
    %v997 = vand.u32 %v583, 4294901760
    %998 = vmatpush1.msra.mxu0 %v997
    %999 = vmatprep.subr.mxu0 0.0
    %v1000 = vand.u32 %v584, 4294901760
    %1001 = vmatpush1.msra.mxu0 %v1000
    %1002 = vmatprep.subr.mxu0 0.0
    %1003 = vmatpush1.msra.mxu0 0.0
    %1004 = vmatprep.subr.mxu0 0.0
    %1005 = vmatpush1.msra.mxu0 0.0
    %1006 = vmatprep.subr.mxu0 0.0
    %1007 = vmatpush1.msra.mxu0 0.0
    %1008 = vmatprep.subr.mxu0 0.0
    %1009 = vmatpush1.msra.mxu0 0.0
    %1010 = vmatprep.subr.mxu0 0.0
    %1011 = vmatpush1.msra.mxu0 0.0
    %1012 = vmatprep.subr.mxu0 0.0
    %1013 = vmatpush1.msra.mxu0 0.0
    %1014 = vmatprep.subr.mxu0 0.0
    %1015 = vmatpush1.msra.mxu0 0.0
    %1016 = vmatprep.subr.mxu0 0.0
    %1017 = vmatpush1.msra.mxu0 0.0
    %1018 = vmatprep.subr.mxu0 0.0
    %1019 = vmatpush1.msra.mxu0 0.0
    %1020 = vmatprep.subr.mxu0 0.0
    %1021 = vmatpush1.msra.mxu0 0.0
    %1022 = vmatprep.subr.mxu0 0.0
    %1023 = vmatpush1.msra.mxu0 0.0
    %1024 = vmatprep.subr.mxu0 0.0
    %1025 = vmatpush1.msra.mxu0 0.0
    %1026 = vmatprep.subr.mxu0 0.0
    %1027 = vmatpush1.msra.mxu0 0.0
    %1028 = vmatprep.subr.mxu0 0.0
    %1029 = vmatpush1.msra.mxu0 0.0
    %1030 = vmatprep.subr.mxu0 0.0
    %1031 = vmatpush1.msra.mxu0 0.0
    %1032 = vmatprep.subr.mxu0 0.0
    %1033 = vmatpush1.msra.mxu0 0.0
    %1034 = vmatprep.mubr.f32.mxu0 0.0
    %v1035 = vand.u32 %v560, 4294901760
    %v1036 = vsub.f32 %v560, %v1035
    %v1037 = vand.u32 %v1036, 4294901760
    %1038 = vmatmul.mubr.f32.gmra.mrb[0].mxu0 %v1037
    %v1039 = vpop.f32.mrb[0].mxu0
    %v1040 = vadd.f32 %v944, %v1039
    %v1041 = vpop.f32.mrb[0].mxu0
    %1042 = vmatprep.mubr.f32.mxu0 0.0
    %v1043 = vand.u32 %v566, 4294901760
    %v1044 = vsub.f32 %v566, %v1043
    %v1045 = vand.u32 %v1044, 4294901760
    %1046 = vmatmul.mubr.f32.gmra.mrb[0].mxu0 %v1045
    %v1047 = vpop.f32.mrb[0].mxu0
    %v1048 = vadd.f32 %v951, %v1047
    %v1049 = vpop.f32.mrb[0].mxu0
    %1050 = vdwg.mxu0
    %1051 = vmatprep.subr.mxu0 0.0
    %v1052 = vand.u32 %v569, 4294901760
    %v1053 = vsub.f32 %v569, %v1052
    %v1054 = vand.u32 %v1053, 4294901760
    %1055 = vmatpush1.msra.mxu0 %v1054
    %1056 = vmatprep.subr.mxu0 0.0
    %v1057 = vand.u32 %v570, 4294901760
    %v1058 = vsub.f32 %v570, %v1057
    %v1059 = vand.u32 %v1058, 4294901760
    %1060 = vmatpush1.msra.mxu0 %v1059
    %1061 = vmatprep.subr.mxu0 0.0
    %v1062 = vand.u32 %v571, 4294901760
    %v1063 = vsub.f32 %v571, %v1062
    %v1064 = vand.u32 %v1063, 4294901760
    %1065 = vmatpush1.msra.mxu0 %v1064
    %1066 = vmatprep.subr.mxu0 0.0
    %v1067 = vand.u32 %v572, 4294901760
    %v1068 = vsub.f32 %v572, %v1067
    %v1069 = vand.u32 %v1068, 4294901760
    %1070 = vmatpush1.msra.mxu0 %v1069
    %1071 = vmatprep.subr.mxu0 0.0
    %v1072 = vand.u32 %v573, 4294901760
    %v1073 = vsub.f32 %v573, %v1072
    %v1074 = vand.u32 %v1073, 4294901760
    %1075 = vmatpush1.msra.mxu0 %v1074
    %1076 = vmatprep.subr.mxu0 0.0
    %v1077 = vand.u32 %v574, 4294901760
    %v1078 = vsub.f32 %v574, %v1077
    %v1079 = vand.u32 %v1078, 4294901760
    %1080 = vmatpush1.msra.mxu0 %v1079
    %1081 = vmatprep.subr.mxu0 0.0
    %v1082 = vand.u32 %v575, 4294901760
    %v1083 = vsub.f32 %v575, %v1082
    %v1084 = vand.u32 %v1083, 4294901760
    %1085 = vmatpush1.msra.mxu0 %v1084
    %1086 = vmatprep.subr.mxu0 0.0
    %v1087 = vand.u32 %v576, 4294901760
    %v1088 = vsub.f32 %v576, %v1087
    %v1089 = vand.u32 %v1088, 4294901760
    %1090 = vmatpush1.msra.mxu0 %v1089
    %1091 = vmatprep.subr.mxu0 0.0
    %v1092 = vand.u32 %v577, 4294901760
    %v1093 = vsub.f32 %v577, %v1092
    %v1094 = vand.u32 %v1093, 4294901760
    %1095 = vmatpush1.msra.mxu0 %v1094
    %1096 = vmatprep.subr.mxu0 0.0
    %v1097 = vand.u32 %v578, 4294901760
    %v1098 = vsub.f32 %v578, %v1097
    %v1099 = vand.u32 %v1098, 4294901760
    %1100 = vmatpush1.msra.mxu0 %v1099
    %1101 = vmatprep.subr.mxu0 0.0
    %v1102 = vand.u32 %v579, 4294901760
    %v1103 = vsub.f32 %v579, %v1102
    %v1104 = vand.u32 %v1103, 4294901760
    %1105 = vmatpush1.msra.mxu0 %v1104
    %1106 = vmatprep.subr.mxu0 0.0
    %v1107 = vand.u32 %v580, 4294901760
    %v1108 = vsub.f32 %v580, %v1107
    %v1109 = vand.u32 %v1108, 4294901760
    %1110 = vmatpush1.msra.mxu0 %v1109
    %1111 = vmatprep.subr.mxu0 0.0
    %v1112 = vand.u32 %v581, 4294901760
    %v1113 = vsub.f32 %v581, %v1112
    %v1114 = vand.u32 %v1113, 4294901760
    %1115 = vmatpush1.msra.mxu0 %v1114
    %1116 = vmatprep.subr.mxu0 0.0
    %v1117 = vand.u32 %v582, 4294901760
    %v1118 = vsub.f32 %v582, %v1117
    %v1119 = vand.u32 %v1118, 4294901760
    %1120 = vmatpush1.msra.mxu0 %v1119
    %1121 = vmatprep.subr.mxu0 0.0
    %v1122 = vand.u32 %v583, 4294901760
    %v1123 = vsub.f32 %v583, %v1122
    %v1124 = vand.u32 %v1123, 4294901760
    %1125 = vmatpush1.msra.mxu0 %v1124
    %1126 = vmatprep.subr.mxu0 0.0
    %v1127 = vand.u32 %v584, 4294901760
    %v1128 = vsub.f32 %v584, %v1127
    %v1129 = vand.u32 %v1128, 4294901760
    %1130 = vmatpush1.msra.mxu0 %v1129
    %1131 = vmatprep.subr.mxu0 0.0
    %1132 = vmatpush1.msra.mxu0 0.0
    %1133 = vmatprep.subr.mxu0 0.0
    %1134 = vmatpush1.msra.mxu0 0.0
    %1135 = vmatprep.subr.mxu0 0.0
    %1136 = vmatpush1.msra.mxu0 0.0
    %1137 = vmatprep.subr.mxu0 0.0
    %1138 = vmatpush1.msra.mxu0 0.0
    %1139 = vmatprep.subr.mxu0 0.0
    %1140 = vmatpush1.msra.mxu0 0.0
    %1141 = vmatprep.subr.mxu0 0.0
    %1142 = vmatpush1.msra.mxu0 0.0
    %1143 = vmatprep.subr.mxu0 0.0
    %1144 = vmatpush1.msra.mxu0 0.0
    %1145 = vmatprep.subr.mxu0 0.0
    %1146 = vmatpush1.msra.mxu0 0.0
    %1147 = vmatprep.subr.mxu0 0.0
    %1148 = vmatpush1.msra.mxu0 0.0
    %1149 = vmatprep.subr.mxu0 0.0
    %1150 = vmatpush1.msra.mxu0 0.0
    %1151 = vmatprep.subr.mxu0 0.0
    %1152 = vmatpush1.msra.mxu0 0.0
    %1153 = vmatprep.subr.mxu0 0.0
    %1154 = vmatpush1.msra.mxu0 0.0
    %1155 = vmatprep.subr.mxu0 0.0
    %1156 = vmatpush1.msra.mxu0 0.0
    %1157 = vmatprep.subr.mxu0 0.0
    %1158 = vmatpush1.msra.mxu0 0.0
    %1159 = vmatprep.subr.mxu0 0.0
    %1160 = vmatpush1.msra.mxu0 0.0
    %1161 = vmatprep.subr.mxu0 0.0
    %1162 = vmatpush1.msra.mxu0 0.0
    %1163 = vmatprep.mubr.f32.mxu0 0.0
    %v1164 = vand.u32 %v560, 4294901760
    %1165 = vmatmul.mubr.f32.gmra.mrb[0].mxu0 %v1164
    %v1166 = vpop.f32.mrb[0].mxu0
    %v1167 = vadd.f32 %v1040, %v1166
    %v1168 = vpop.f32.mrb[0].mxu0
    %1169 = vmatprep.mubr.f32.mxu0 0.0
    %v1170 = vand.u32 %v566, 4294901760
    %1171 = vmatmul.mubr.f32.gmra.mrb[0].mxu0 %v1170
    %v1172 = vpop.f32.mrb[0].mxu0
    %v1173 = vadd.f32 %v1048, %v1172
    %v1174 = vpop.f32.mrb[0].mxu0
    %1175 = vdwg.mxu0
    %1176 = vmatprep.subr.mxu0 0.0
    %v1177 = vand.u32 %v569, 4294901760
    %1178 = vmatpush1.msra.mxu0 %v1177
    %1179 = vmatprep.subr.mxu0 0.0
    %v1180 = vand.u32 %v570, 4294901760
    %1181 = vmatpush1.msra.mxu0 %v1180
    %1182 = vmatprep.subr.mxu0 0.0
    %v1183 = vand.u32 %v571, 4294901760
    %1184 = vmatpush1.msra.mxu0 %v1183
    %1185 = vmatprep.subr.mxu0 0.0
    %v1186 = vand.u32 %v572, 4294901760
    %1187 = vmatpush1.msra.mxu0 %v1186
    %1188 = vmatprep.subr.mxu0 0.0
    %v1189 = vand.u32 %v573, 4294901760
    %1190 = vmatpush1.msra.mxu0 %v1189
    %1191 = vmatprep.subr.mxu0 0.0
    %v1192 = vand.u32 %v574, 4294901760
    %1193 = vmatpush1.msra.mxu0 %v1192
    %1194 = vmatprep.subr.mxu0 0.0
    %v1195 = vand.u32 %v575, 4294901760
    %1196 = vmatpush1.msra.mxu0 %v1195
    %1197 = vmatprep.subr.mxu0 0.0
    %v1198 = vand.u32 %v576, 4294901760
    %1199 = vmatpush1.msra.mxu0 %v1198
    %1200 = vmatprep.subr.mxu0 0.0
    %v1201 = vand.u32 %v577, 4294901760
    %1202 = vmatpush1.msra.mxu0 %v1201
    %1203 = vmatprep.subr.mxu0 0.0
    %v1204 = vand.u32 %v578, 4294901760
    %1205 = vmatpush1.msra.mxu0 %v1204
    %1206 = vmatprep.subr.mxu0 0.0
    %v1207 = vand.u32 %v579, 4294901760
    %1208 = vmatpush1.msra.mxu0 %v1207
    %1209 = vmatprep.subr.mxu0 0.0
    %v1210 = vand.u32 %v580, 4294901760
    %1211 = vmatpush1.msra.mxu0 %v1210
    %1212 = vmatprep.subr.mxu0 0.0
    %v1213 = vand.u32 %v581, 4294901760
    %1214 = vmatpush1.msra.mxu0 %v1213
    %1215 = vmatprep.subr.mxu0 0.0
    %v1216 = vand.u32 %v582, 4294901760
    %1217 = vmatpush1.msra.mxu0 %v1216
    %1218 = vmatprep.subr.mxu0 0.0
    %v1219 = vand.u32 %v583, 4294901760
    %1220 = vmatpush1.msra.mxu0 %v1219
    %1221 = vmatprep.subr.mxu0 0.0
    %v1222 = vand.u32 %v584, 4294901760
    %1223 = vmatpush1.msra.mxu0 %v1222
    %1224 = vmatprep.subr.mxu0 0.0
    %1225 = vmatpush1.msra.mxu0 0.0
    %1226 = vmatprep.subr.mxu0 0.0
    %1227 = vmatpush1.msra.mxu0 0.0
    %1228 = vmatprep.subr.mxu0 0.0
    %1229 = vmatpush1.msra.mxu0 0.0
    %1230 = vmatprep.subr.mxu0 0.0
    %1231 = vmatpush1.msra.mxu0 0.0
    %1232 = vmatprep.subr.mxu0 0.0
    %1233 = vmatpush1.msra.mxu0 0.0
    %1234 = vmatprep.subr.mxu0 0.0
    %1235 = vmatpush1.msra.mxu0 0.0
    %1236 = vmatprep.subr.mxu0 0.0
    %1237 = vmatpush1.msra.mxu0 0.0
    %1238 = vmatprep.subr.mxu0 0.0
    %1239 = vmatpush1.msra.mxu0 0.0
    %1240 = vmatprep.subr.mxu0 0.0
    %1241 = vmatpush1.msra.mxu0 0.0
    %1242 = vmatprep.subr.mxu0 0.0
    %1243 = vmatpush1.msra.mxu0 0.0
    %1244 = vmatprep.subr.mxu0 0.0
    %1245 = vmatpush1.msra.mxu0 0.0
    %1246 = vmatprep.subr.mxu0 0.0
    %1247 = vmatpush1.msra.mxu0 0.0
    %1248 = vmatprep.subr.mxu0 0.0
    %1249 = vmatpush1.msra.mxu0 0.0
    %1250 = vmatprep.subr.mxu0 0.0
    %1251 = vmatpush1.msra.mxu0 0.0
    %1252 = vmatprep.subr.mxu0 0.0
    %1253 = vmatpush1.msra.mxu0 0.0
    %1254 = vmatprep.subr.mxu0 0.0
    %1255 = vmatpush1.msra.mxu0 0.0
    %1256 = vmatprep.mubr.f32.mxu0 0.0
    %v1257 = vand.u32 %v560, 4294901760
    %1258 = vmatmul.mubr.f32.gmra.mrb[0].mxu0 %v1257
    %v1259 = vpop.f32.mrb[0].mxu0
    %v1260 = vadd.f32 %v1167, %v1259
    %v1261 = vpop.f32.mrb[0].mxu0
    %1262 = vmatprep.mubr.f32.mxu0 0.0
    %v1263 = vand.u32 %v566, 4294901760
    %1264 = vmatmul.mubr.f32.gmra.mrb[0].mxu0 %v1263
    %v1265 = vpop.f32.mrb[0].mxu0
    %v1266 = vadd.f32 %v1173, %v1265
    %v1267 = vpop.f32.mrb[0].mxu0
    %1268 = vdwg.mxu0
    %1269 = vst [vmem:[#allocation8] sm:$0xff] %v1260
    %1270 = vst [vmem:[#allocation8 + $0x8] sm:$0xff] %v1266
    // Predicated region
    $region26: #{tpu_custom_call.1} parent=1 // pred_check
      _
    $region27: #{tpu_custom_call.1} parent=1 // pred_check_branch
      %1272 = sbr.rel (0) target = $region29
    $region28: #{tpu_custom_call.1} parent=1 // pred_region
      %s1274 = ssub.s32 256, 256
      %1275 = vsyncadd [#allocation4], %s1274
      %s1276 = sshll.u32 [#allocation8], 4
      %s1277 = int_to_ptr.vmem [resolvable:$true] %s1276
      %1282 = dma.vmem_to_hbm [thread:$0]  %s1277, 256, %s3, [#allocation4], 128, 128, 8
    $region29: #{tpu_custom_call.1} parent=1 // pred_fallthru
      _
    // Predicated region
    $region30: #{tpu_custom_call.1} parent=1 // pred_check
      _
    $region31: #{tpu_custom_call.1} parent=1 // pred_check_branch
      %1284 = sbr.rel (0) target = $region33
    $region32: #{tpu_custom_call.1} parent=1 // pred_region
      %1285 = dma.done [#allocation4], 256
    $region33: #{tpu_custom_call.1} parent=1 // pred_fallthru
      _
    %1286 = vsyncpa [#allocation3], 1
    %1287 = vsyncpa [#allocation6], 1
    %1288 = vsyncpa [#allocation4], 1

</llo_original>
